<compile_context>
chip_gen: v7x
topology: tpu7x:2x2x1
jax: 0.10.0
libtpu: 0.0.40
codegen_flags: <defaults>
</compile_context>

<pallas_src>
import numpy as np
import jax
import jax.numpy as jnp
from jax import lax
from jax.experimental import pallas as pl
from jax.experimental.pallas import tpu as pltpu

# ---------------- config (small, consistent with the module's __init__) ----------------
CFG = dict(
    fs=8000,
    win_len=64,
    hop_len=32,
    n_fft=64,
    n_mels=32,
    n_frames=8,
    overlap=0.5,
    arch="grafp",
    gain=3.0, pitch_shift=2.0, min_rate=0.9, max_rate=1.1,
)

N_FFT = CFG["n_fft"]
N_FREQ = N_FFT // 2 + 1          # 33
N_FREQ_PAD = 64                  # 33 -> 64 (lane friendly); re | im packed -> 128
N_MELS = CFG["n_mels"]           # 32
HOP = CFG["hop_len"]             # 32
WIN = CFG["win_len"]             # 64
FS = CFG["fs"]
AMIN = 1e-10
DB_SCALE = 10.0 / np.log(10.0)   # 10*log10(x) == DB_SCALE * ln(x)

assert N_FFT == 2 * HOP, "frame-building reshape trick assumes n_fft == 2*hop"


# ---------------- deterministic "parameter" setup (spec matrices) ----------------
def _hann(n):
    k = np.arange(n)
    return 0.5 - 0.5 * np.cos(2.0 * np.pi * k / n)


def _raw_matrices():
    """Unpacked windowed-DFT matrices [n_fft, n_freq] and HTK mel fb [n_freq, n_mels]."""
    win = np.zeros(N_FFT, dtype=np.float64)
    off = (N_FFT - WIN) // 2
    win[off:off + WIN] = _hann(WIN)
    n = np.arange(N_FFT)[:, None]
    k = np.arange(N_FREQ)[None, :]
    ang = 2.0 * np.pi * n * k / N_FFT
    cos_w = (win[:, None] * np.cos(ang)).astype(np.float32)
    sin_w = (win[:, None] * -np.sin(ang)).astype(np.float32)

    def hz2mel(f):
        return 2595.0 * np.log10(1.0 + f / 700.0)

    def mel2hz(m):
        return 700.0 * (10.0 ** (m / 2595.0) - 1.0)

    all_freqs = np.linspace(0.0, FS / 2.0, N_FREQ)
    m_pts = np.linspace(hz2mel(0.0), hz2mel(FS / 2.0), N_MELS + 2)
    f_pts = mel2hz(m_pts)
    f_diff = f_pts[1:] - f_pts[:-1]
    slopes = f_pts[None, :] - all_freqs[:, None]            # [n_freq, n_mels+2]
    down = -slopes[:, :-2] / f_diff[:-1]
    up = slopes[:, 2:] / f_diff[1:]
    fb = np.maximum(0.0, np.minimum(down, up)).astype(np.float32)
    return cos_w, sin_w, fb


def build_spec_matrices(weights_dtype=jnp.float32):
    """Packed matrices for the kernel, materialized ONCE in their final dtype.

    w_comb : [n_fft, 128]   cols 0..32 = windowed cos, cols 64..96 = windowed -sin,
                            zero elsewhere -> single MXU matmul gives re|im packed.
                            `weights_dtype=jnp.bfloat16` is a valid option on
                            v6e/v7x (frames stay f32; accumulation is f32).
    mel_t  : [n_mels, 128]  mel filterbank duplicated over the re and im halves and
                            transposed, so  mel^T = mel_t @ power_packed^T.  Kept
                            f32 (it multiplies the already-f32 power spectrum).
    """
    cos_w, sin_w, fb = _raw_matrices()
    w = np.zeros((N_FFT, 2 * N_FREQ_PAD), np.float32)
    w[:, :N_FREQ] = cos_w
    w[:, N_FREQ_PAD:N_FREQ_PAD + N_FREQ] = sin_w

    fb_pad = np.zeros((N_FREQ_PAD, N_MELS), np.float32)
    fb_pad[:N_FREQ] = fb
    mel_t = np.concatenate([fb_pad, fb_pad], axis=0).T.copy()   # [n_mels, 128]
    return jnp.asarray(w, dtype=weights_dtype), jnp.asarray(mel_t, dtype=jnp.float32)


# ---------------- framing glue (center=True, reflect padding, like torch.stft) ----------------
def frame_audio(x):
    """x: [B, L] -> frames [B, T, n_fft] with T = L // hop + 1 (no gather)."""
    B, L = x.shape
    pad = N_FFT // 2
    assert L > pad, "audio must be longer than n_fft//2 for reflect padding"
    T = L // HOP + 1
    xp = jnp.pad(x, ((0, 0), (pad, pad)), mode="reflect")
    xp = xp[:, :(T + 1) * HOP]                       # exactly the samples framing needs
    blocks = xp.reshape(B, T + 1, HOP)               # n_fft == 2*hop
    # frame t = [block t | block t+1]  == xp[t*hop : t*hop + n_fft]
    return jnp.concatenate([blocks[:, :T, :], blocks[:, 1:, :]], axis=-1)


# ---------------- Pallas kernel: windowed DFT -> power -> mel -> dB (transposed out) ---------
def logmel_kernel(frames_ref, w_ref, melt_ref, out_ref):
    # frames_ref: [1, M, n_fft] with M = B*T (all samples of one view, flattened)
    # w_ref:      [n_fft, 128]   packed windowed (cos | -sin) DFT matrix
    # melt_ref:   [n_mels, 128]  duplicated + zero-padded mel filterbank, transposed
    # out_ref:    [1, n_mels, M] lane-dense output slab for this view
    f = frames_ref[0]                                                    # [M, n_fft]
    # Single combined (windowed) DFT matmul over the whole view: M rows fill the MXU.
    s = jnp.dot(f, w_ref[...], preferred_element_type=jnp.float32)      # [M, 128]
    p = s * s                                                            # |re|^2 , |im|^2
    # Mel filterbank with fb as LHS, contracting both lane dims -> result is already
    # transposed: [n_mels, M].  (fb rows are duplicated over the re/im halves, so this
    # sums re^2 + im^2 implicitly.)
    mel_t = lax.dot_general(
        melt_ref[...], p,
        dimension_numbers=(((1,), (1,)), ((), ())),
        preferred_element_type=jnp.float32)                              # [n_mels, M]
    # AmplitudeToDB(stype='power', top_db=None, ref=1.0): 10*log10(max(x, 1e-10))
    out_ref[0] = DB_SCALE * jnp.log(jnp.maximum(mel_t, AMIN))


def gpu_transform_sample_id_forward(x_i, x_j, w_comb, mel_t):
    """Train-mode forward: (X_i, X_j) = (logmelspec(x_i), logmelspec(x_j)).

    Both views are processed by a SINGLE pallas_call with grid=(2,): one parallel
    grid step per view (maps onto both v7x TensorCores; near-free on v5e/v6e).
    Each step does one big [B*T, n_fft] DFT matmul instead of 2B tiny ones.
    """
    assert x_i.shape == x_j.shape
    B, L = x_i.shape
    x = jnp.concatenate([x_i, x_j], axis=0).astype(jnp.float32)          # [2B, L]
    frames = frame_audio(x)                                              # [2B, T, n_fft]
    T = frames.shape[1]
    M = B * T
    # One flat [M, n_fft] slab per view (leading-dim collapse; rows ordered b-major).
    frames2 = frames.reshape(2, M, N_FFT)

    # VMEM note (v7x has 64 MiB physical / 32 MiB default scoped): per-step working set
    # is 2x(frames block) + spectrum temp + out block = M*(64+128+32)*4 B double-ish
    # buffered; keep B*T under ~2e4 rows per step before raising vmem_limit_bytes.
    out = pl.pallas_call(
        logmel_kernel,
        out_shape=jax.ShapeDtypeStruct((2, N_MELS, M), jnp.float32),
        grid_spec=pltpu.PrefetchScalarGridSpec(
            num_scalar_prefetch=0,
            grid=(2,),                                   # one step per view
            in_specs=[
                pl.BlockSpec((1, M, N_FFT), lambda v: (v, 0, 0)),
                pl.BlockSpec((N_FFT, 2 * N_FREQ_PAD), lambda v: (0, 0)),
                pl.BlockSpec((N_MELS, 2 * N_FREQ_PAD), lambda v: (0, 0)),
            ],
            out_specs=pl.BlockSpec((1, N_MELS, M), lambda v: (v, 0, 0)),
        ),
        compiler_params=pltpu.CompilerParams(
            dimension_semantics=("parallel",)),          # 2 TCs on v7x; harmless elsewhere
    )(frames2, w_comb, mel_t)

    # [2, n_mels, B*T] -> per-view [B, n_mels, T] (torchaudio layout), cheap wrapper-side.
    out = out.reshape(2, N_MELS, B, T).transpose(0, 2, 1, 3)
    return out[0], out[1]


# ---------------- pure-JAX reference (unpacked matrices) for a sanity check ----------------
def _reference_logmel(x):
    cos_w, sin_w, fb = _raw_matrices()
    frames = frame_audio(x.astype(jnp.float32))
    hp = lax.Precision.HIGHEST
    re = jnp.einsum("btf,fk->btk", frames, jnp.asarray(cos_w), precision=hp)
    im = jnp.einsum("btf,fk->btk", frames, jnp.asarray(sin_w), precision=hp)
    power = re * re + im * im
    mel = jnp.einsum("btk,km->btm", power, jnp.asarray(fb), precision=hp)
    db = 10.0 * jnp.log10(jnp.maximum(mel, AMIN))
    return jnp.transpose(db, (0, 2, 1))


if __name__ == "__main__":
    key = jax.random.PRNGKey(0)
    k1, k2 = jax.random.split(key)
    B, L = 2, 992                      # T = 992 // 32 + 1 = 32 frames
    x_i = jax.random.normal(k1, (B, L), dtype=jnp.float32)
    x_j = jax.random.normal(k2, (B, L), dtype=jnp.float32)

    w_comb, mel_t = build_spec_matrices()   # f32 (bf16 option available for v6e/v7x)

    X_i, X_j = gpu_transform_sample_id_forward(x_i, x_j, w_comb, mel_t)
    jax.block_until_ready((X_i, X_j))

    T = L // HOP + 1
    assert X_i.shape == (B, N_MELS, T), X_i.shape
    assert X_j.shape == (B, N_MELS, T), X_j.shape
    assert bool(jnp.all(jnp.isfinite(X_i))) and bool(jnp.all(jnp.isfinite(X_j)))

    # numerical sanity check against an unfused, unpacked pure-JAX reference
    R_i = _reference_logmel(x_i)
    R_j = _reference_logmel(x_j)
    assert bool(jnp.allclose(X_i, R_i, rtol=1e-2, atol=1e-1)), float(jnp.max(jnp.abs(X_i - R_i)))
    assert bool(jnp.allclose(X_j, R_j, rtol=1e-2, atol=1e-1)), float(jnp.max(jnp.abs(X_j - R_j)))

    print("KERNEL_OK")
</pallas_src>

<mosaic_0001>
module attributes {stable_mosaic.version = 11 : i64} {
  func.func @logmel_kernel(%arg0: i32, %arg1: memref<1x64x64xf32, #tpu.memory_space<vmem>>, %arg2: memref<64x128xf32, #tpu.memory_space<vmem>>, %arg3: memref<32x128xf32, #tpu.memory_space<vmem>>, %arg4: memref<1x32x64xf32, #tpu.memory_space<vmem>>) attributes {dimension_semantics = [#tpu.dimension_semantics<parallel>], iteration_bounds = array<i64: 2>, scalar_prefetch = 0 : i64, scratch_operands = 0 : i64, tpu.core_type = #tpu.core_type<tc>, window_params = [{transform_indices = @transform_0, window_bounds = array<i64: 1, 64, 64>}, {pipeline_mode = #tpu.pipeline_mode<synchronous>, transform_indices = @transform_1, window_bounds = array<i64: 64, 128>}, {pipeline_mode = #tpu.pipeline_mode<synchronous>, transform_indices = @transform_2, window_bounds = array<i64: 32, 128>}, {transform_indices = @transform_3, window_bounds = array<i64: 1, 32, 64>}]} {
    %c0 = arith.constant 0 : index
    %c0_0 = arith.constant 0 : index
    %c0_1 = arith.constant 0 : index
    %0 = vector.load %arg1[%c0, %c0_0, %c0_1] : memref<1x64x64xf32, #tpu.memory_space<vmem>>, vector<1x64x64xf32>
    %1 = vector.shape_cast %0 : vector<1x64x64xf32> to vector<64x64xf32>
    %c0_2 = arith.constant 0 : index
    %c0_3 = arith.constant 0 : index
    %2 = vector.load %arg2[%c0_2, %c0_3] : memref<64x128xf32, #tpu.memory_space<vmem>>, vector<64x128xf32>
    %cst = arith.constant dense<0.000000e+00> : vector<64x128xf32>
    %3 = tpu.matmul %1, %2, %cst {dimension_numbers = #tpu.dot_dimension_numbers<[1], [0], [0], [1], [0, 0, 1, 1], [], []>} : vector<64x64xf32>, vector<64x128xf32>, vector<64x128xf32> -> vector<64x128xf32>
    %4 = arith.mulf %3, %3 : vector<64x128xf32>
    %c0_4 = arith.constant 0 : index
    %c0_5 = arith.constant 0 : index
    %5 = vector.load %arg3[%c0_4, %c0_5] : memref<32x128xf32, #tpu.memory_space<vmem>>, vector<32x128xf32>
    %cst_6 = arith.constant dense<0.000000e+00> : vector<32x64xf32>
    %6 = tpu.matmul %5, %4, %cst_6 {dimension_numbers = #tpu.dot_dimension_numbers<[1], [1], [0], [0], [0, 0, 1, 0], [], []>} : vector<32x128xf32>, vector<64x128xf32>, vector<32x64xf32> -> vector<32x64xf32>
    %cst_7 = arith.constant 1.000000e-10 : f32
    %7 = vector.broadcast %cst_7 : f32 to vector<32x64xf32>
    %8 = arith.maximumf %6, %7 : vector<32x64xf32>
    %9 = math.log %8 : vector<32x64xf32>
    %cst_8 = arith.constant 4.34294462 : f32
    %10 = vector.broadcast %cst_8 : f32 to vector<32x64xf32>
    %11 = arith.mulf %10, %9 : vector<32x64xf32>
    %c0_9 = arith.constant 0 : index
    %c0_10 = arith.constant 0 : index
    %c0_11 = arith.constant 0 : index
    %12 = vector.load %arg4[%c0_9, %c0_10, %c0_11] : memref<1x32x64xf32, #tpu.memory_space<vmem>>, vector<1x32x64xf32>
    %13 = vector.shape_cast %12 : vector<1x32x64xf32> to vector<32x64xf32>
    %14 = vector.shape_cast %11 : vector<32x64xf32> to vector<1x32x64xf32>
    tpu.vector_store %arg4[%c0_9, %c0_10, %c0_11], %14 {strides = array<i32>} : memref<1x32x64xf32, #tpu.memory_space<vmem>>, vector<1x32x64xf32>,
    return
  }
  func.func @transform_0(%arg0: i32) -> (i32, i32, i32) {
    %c0_i32 = arith.constant 0 : i32
    %c0_i32_0 = arith.constant 0 : i32
    %c0_i32_1 = arith.constant 0 : i32
    return %arg0, %c0_i32, %c0_i32_0 : i32, i32, i32
  }
  func.func @transform_1(%arg0: i32) -> (i32, i32) {
    %c0_i32 = arith.constant 0 : i32
    %c0_i32_0 = arith.constant 0 : i32
    %c0_i32_1 = arith.constant 0 : i32
    return %c0_i32, %c0_i32_0 : i32, i32
  }
  func.func @transform_2(%arg0: i32) -> (i32, i32) {
    %c0_i32 = arith.constant 0 : i32
    %c0_i32_0 = arith.constant 0 : i32
    %c0_i32_1 = arith.constant 0 : i32
    return %c0_i32, %c0_i32_0 : i32, i32
  }
  func.func @transform_3(%arg0: i32) -> (i32, i32, i32) {
    %c0_i32 = arith.constant 0 : i32
    %c0_i32_0 = arith.constant 0 : i32
    %c0_i32_1 = arith.constant 0 : i32
    return %arg0, %c0_i32, %c0_i32_0 : i32, i32, i32
  }
}

</mosaic_0001>

<llo_original>
// kernel: tpu_custom_call.1
$region0: #{tpu_custom_call.1}
  #allocation0 [shape = 'u32[]', space=smem, size = 0x4, offset = 0x4, fixed_abs, tag = 'smem constant byte address 0x4 - core index']
  #allocation1 [shape = 'u32[144,128]{1,0:T(1,128)}', space=vmem, size = 0x12000, scoped, tag = 'internal scratch']
  %s0 = inlined_call_operand.hbm [shape: f32[2,64,64], index: 0, kind: input, shape index: {}]
  %s1 = inlined_call_operand.hbm [shape: f32[64,128], index: 1, kind: input, shape index: {}]
  %s2 = inlined_call_operand.hbm [shape: f32[32,128], index: 2, kind: input, shape index: {}]
  %s3 = inlined_call_operand.hbm [shape: f32[2,32,64], index: 3, kind: output, shape index: {}]
  %s4 = sld [smem:[#allocation0]]
  $region57: #{tpu_custom_call.1} parent=0
    _
  %s6 = ssub.s32 1, %s4
  %s7 = scalar_select 0, %s6, %s4
  $region1: #{tpu_custom_call.1} parent=0
    #allocation2 [shape = 'u8[65536]{0}', space=vmem, size = 0x10000, scoped, tag = 'input window, operand 0']
    #allocation3 [shape = 's32[2]{0}', space=sflag, size = 0x8, scoped, tag = 'scoped memory for tpu_custom_call.1']
    #allocation4 [shape = 's32[2]{0}', space=sflag, size = 0x8, scoped, tag = 'scoped memory for tpu_custom_call.1']
    #allocation5 [shape = 'u8[32768]{0}', space=vmem, size = 0x8000, scoped, tag = 'input window, operand 1, single buffered']
    #allocation6 [shape = 's32[1]{0}', space=sflag, size = 0x4, scoped, tag = 'scoped memory for tpu_custom_call.1']
    #allocation7 [shape = 'u8[16384]{0}', space=vmem, size = 0x4000, scoped, tag = 'input window, operand 2, single buffered']
    #allocation8 [shape = 'u8[32768]{0}', space=vmem, size = 0x8000, scoped, tag = 'output window, operand 0']
    %8 = vsyncpa [#allocation3], 0
    %s9 = scalar_lea.sflag [#allocation3], 1
    %10 = vsyncpa %s9, 0
    %11 = vsyncpa [#allocation6], 0
    %12 = vsyncpa [#allocation4], 0
    %s13 = scalar_lea.sflag [#allocation4], 1
    %14 = vsyncpa %s13, 0
    loop: start=0, step=1, limit=4
    $region2: #{tpu_custom_call.1} parent=1 // loop_pre_header
      _
    $region3: #{tpu_custom_call.1} parent=1 // loop_header
      %s16 = sphi 0, %s20
      %p17 = scmp.ge.s32.totalorder %s16, 4
      %s26 = sphi 0, %s28
      %s29 = sphi 0, %s26
      %s30 = sphi 0, %s29
      %s46 = sphi 0, %s30
      %s50 = sphi 0, %s50
      %s52 = sphi 0, %s50
      %s53 = sphi 0, %s52
      %s67 = sphi 0, %s53
      %s71 = sphi 0, %s71
      %s73 = sphi 0, %s71
      %s74 = sphi 0, %s73
      %s88 = sphi 0, %s74
      %s94 = sphi 0, %s96
      %s97 = sphi 0, %s94
      %s98 = sphi 0, %s97
      %s114 = sphi 0, %s98
    $region4: #{tpu_custom_call.1} parent=1 // loop_header_branch
      %19 = sbr.rel (%p17) target = $region8
    $region5: #{tpu_custom_call.1} parent=1 // loop_body
      %s21 = ssub.s32 %s16, 1
      %s22 = ssub.s32 %s16, 2
      %s23 = sadd.s32 %s16, 1
      %s24 = ssub.s32 %s16, %s23
      %p25 = scmp.eq.s32.totalorder %s24, 0
      %s27 = sadd.s32 %s26, 1
      %s28 = scalar_select %p25, %s26, %s27
      %p31 = pneg %p25
      %p32 = scmp.eq.s32.totalorder %s16, 1
      %p33 = por %p31, %p32
      %p34 = scmp.ne.s32.totalorder %s26, %s29
      %p35 = scmp.eq.s32.totalorder %s16, 0
      %p36 = por %p34, %p35
      %p37 = scmp.ne.s32.totalorder %s26, %s29
      %p38 = scmp.eq.s32.totalorder %s21, 1
      %p39 = por %p37, %p38
      %p40 = scmp.ne.s32.totalorder %s29, %s30
      %p41 = scmp.eq.s32.totalorder %s21, 0
      %p42 = por %p40, %p41
      %p43 = scmp.ne.s32.totalorder %s29, %s30
      %p44 = scmp.eq.s32.totalorder %s22, 1
      %p45 = por %p43, %p44
      %p47 = scmp.ne.s32.totalorder %s30, %s46
      %p48 = scmp.eq.s32.totalorder %s22, 0
      %p49 = por %p47, %p48
      %s51 = sadd.s32 %s50, 1
      %p54 = scmp.eq.s32.totalorder %s16, 1
      %p55 = scmp.ne.s32.totalorder %s50, %s52
      %p56 = scmp.eq.s32.totalorder %s16, 0
      %p57 = por %p55, %p56
      %p58 = scmp.ne.s32.totalorder %s50, %s52
      %p59 = scmp.eq.s32.totalorder %s21, 1
      %p60 = por %p58, %p59
      %p61 = scmp.ne.s32.totalorder %s52, %s53
      %p62 = scmp.eq.s32.totalorder %s21, 0
      %p63 = por %p61, %p62
      %p64 = scmp.ne.s32.totalorder %s52, %s53
      %p65 = scmp.eq.s32.totalorder %s22, 1
      %p66 = por %p64, %p65
      %p68 = scmp.ne.s32.totalorder %s53, %s67
      %p69 = scmp.eq.s32.totalorder %s22, 0
      %p70 = por %p68, %p69
      %s72 = sadd.s32 %s71, 1
      %p75 = scmp.eq.s32.totalorder %s16, 1
      %p76 = scmp.ne.s32.totalorder %s71, %s73
      %p77 = scmp.eq.s32.totalorder %s16, 0
      %p78 = por %p76, %p77
      %p79 = scmp.ne.s32.totalorder %s71, %s73
      %p80 = scmp.eq.s32.totalorder %s21, 1
      %p81 = por %p79, %p80
      %p82 = scmp.ne.s32.totalorder %s73, %s74
      %p83 = scmp.eq.s32.totalorder %s21, 0
      %p84 = por %p82, %p83
      %p85 = scmp.ne.s32.totalorder %s73, %s74
      %p86 = scmp.eq.s32.totalorder %s22, 1
      %p87 = por %p85, %p86
      %p89 = scmp.ne.s32.totalorder %s74, %s88
      %p90 = scmp.eq.s32.totalorder %s22, 0
      %p91 = por %p89, %p90
      %s92 = ssub.s32 %s16, %s23
      %p93 = scmp.eq.s32.totalorder %s92, 0
      %s95 = sadd.s32 %s94, 1
      %s96 = scalar_select %p93, %s94, %s95
      %p99 = pneg %p93
      %p100 = scmp.eq.s32.totalorder %s16, 1
      %p101 = por %p99, %p100
      %p102 = scmp.ne.s32.totalorder %s94, %s97
      %p103 = scmp.eq.s32.totalorder %s16, 0
      %p104 = por %p102, %p103
      %p105 = scmp.ne.s32.totalorder %s94, %s97
      %p106 = scmp.eq.s32.totalorder %s21, 1
      %p107 = por %p105, %p106
      %p108 = scmp.ne.s32.totalorder %s97, %s98
      %p109 = scmp.eq.s32.totalorder %s21, 0
      %p110 = por %p108, %p109
      %p111 = scmp.ne.s32.totalorder %s97, %s98
      %p112 = scmp.eq.s32.totalorder %s22, 1
      %p113 = por %p111, %p112
      %p115 = scmp.ne.s32.totalorder %s98, %s114
      %p116 = scmp.eq.s32.totalorder %s22, 0
      %p117 = por %p115, %p116
      %p118 = scmp.le.s32.totalorder 1, %s16
      %p119 = scmp.lt.s32.totalorder %s16, 3
      %p120 = pnand %p118, %p119
      %p121 = pneg %p120
      // Predicated region
      $region9: #{tpu_custom_call.1} parent=5 // pred_check
        _
      $region10: #{tpu_custom_call.1} parent=5 // pred_check_branch
        %123 = sbr.rel (%p120) target = $region12
      $region11: #{tpu_custom_call.1} parent=5 // pred_region
        %s124 = ssub.s32 %s16, 1
        // Predicated region
        $region13: #{tpu_custom_call.1} parent=11 // pred_check
          %p125 = pneg %p63
        $region14: #{tpu_custom_call.1} parent=11 // pred_check_branch
          %127 = sbr.rel (%p125) target = $region16
        $region15: #{tpu_custom_call.1} parent=11 // pred_region
          %s129 = ssub.s32 1024, 1024
          %130 = vsyncadd [#allocation6], %s129
          %s131 = sshll.u32 [#allocation5], 4
          %s132 = int_to_ptr.vmem [resolvable:$true] %s131
          %137 = dma.hbm_to_vmem [thread:$0]  %s1, 1024, %s132, [#allocation6], 128, 128, 8
        $region16: #{tpu_custom_call.1} parent=11 // pred_fallthru
          _
        // Predicated region
        $region17: #{tpu_custom_call.1} parent=11 // pred_check
          %p138 = pneg %p84
        $region18: #{tpu_custom_call.1} parent=11 // pred_check_branch
          %140 = sbr.rel (%p138) target = $region20
        $region19: #{tpu_custom_call.1} parent=11 // pred_region
          %s142 = ssub.s32 512, 512
          %143 = vsyncadd [#allocation6], %s142
          %s144 = sshll.u32 [#allocation7], 4
          %s145 = int_to_ptr.vmem [resolvable:$true] %s144
          %150 = dma.hbm_to_vmem [thread:$0]  %s2, 512, %s145, [#allocation6], 128, 128, 8
        $region20: #{tpu_custom_call.1} parent=11 // pred_fallthru
          _
      $region12: #{tpu_custom_call.1} parent=5 // pred_fallthru
        _
      %p151 = scmp.lt.s32.totalorder %s16, 2
      // Predicated region
      $region21: #{tpu_custom_call.1} parent=5 // pred_check
        %p152 = pneg %p151
      $region22: #{tpu_custom_call.1} parent=5 // pred_check_branch
        %154 = sbr.rel (%p152) target = $region24
      $region23: #{tpu_custom_call.1} parent=5 // pred_region
        // Predicated region
        $region25: #{tpu_custom_call.1} parent=23 // pred_check
          %p155 = pneg %p36
        $region26: #{tpu_custom_call.1} parent=23 // pred_check_branch
          %157 = sbr.rel (%p155) target = $region28
        $region27: #{tpu_custom_call.1} parent=23 // pred_region
          %s158 = sand.u32 %s26, 1
          %s159 = scalar_lea.sflag [#allocation3], %s158
          %s160 = sand.u32 %s26, 1
          %s161 = smul.addr %s160, 64
          %s162 = scalar_lea.vmem [#allocation2], %s161
          %s164 = ssub.s32 1024, 1024
          %165 = vsyncadd %s159, %s164
          %s166 = smul.addr %s16, 8
          %s167 = smul.addr %s166, 128
          %s168 = scalar_lea.hbm %s0, %s167
          %s169 = sshll.u32 %s162, 4
          %s170 = int_to_ptr.vmem [resolvable:$true] %s169
          %175 = dma.hbm_to_vmem [thread:$0]  %s168, 1024, %s170, %s159, 128, 128, 8
        $region28: #{tpu_custom_call.1} parent=23 // pred_fallthru
          _
      $region24: #{tpu_custom_call.1} parent=5 // pred_fallthru
        _
      %p176 = scmp.le.s32.totalorder 1, %s16
      %p177 = scmp.lt.s32.totalorder %s16, 3
      %p178 = pnand %p176, %p177
      %p179 = pneg %p178
      // Predicated region
      $region29: #{tpu_custom_call.1} parent=5 // pred_check
        _
      $region30: #{tpu_custom_call.1} parent=5 // pred_check_branch
        %181 = sbr.rel (%p178) target = $region32
      $region31: #{tpu_custom_call.1} parent=5 // pred_region
        %s182 = ssub.s32 %s16, 1
        %s183 = sand.u32 %s29, 1
        %s184 = scalar_lea.sflag [#allocation3], %s183
        %s185 = sand.u32 %s29, 1
        %s186 = smul.addr %s185, 64
        %s187 = scalar_lea.vmem [#allocation2], %s186
        // Predicated region
        $region33: #{tpu_custom_call.1} parent=31 // pred_check
          %p188 = pneg %p42
        $region34: #{tpu_custom_call.1} parent=31 // pred_check_branch
          %190 = sbr.rel (%p188) target = $region36
        $region35: #{tpu_custom_call.1} parent=31 // pred_region
          %191 = dma.done %s184, 1024
        $region36: #{tpu_custom_call.1} parent=31 // pred_fallthru
          _
        // Predicated region
        $region37: #{tpu_custom_call.1} parent=31 // pred_check
          %p192 = pneg %p63
        $region38: #{tpu_custom_call.1} parent=31 // pred_check_branch
          %194 = sbr.rel (%p192) target = $region40
        $region39: #{tpu_custom_call.1} parent=31 // pred_region
          %195 = dma.done [#allocation6], 1024
        $region40: #{tpu_custom_call.1} parent=31 // pred_fallthru
          _
        // Predicated region
        $region41: #{tpu_custom_call.1} parent=31 // pred_check
          %p196 = pneg %p84
        $region42: #{tpu_custom_call.1} parent=31 // pred_check_branch
          %198 = sbr.rel (%p196) target = $region44
        $region43: #{tpu_custom_call.1} parent=31 // pred_region
          %199 = dma.done [#allocation6], 512
        $region44: #{tpu_custom_call.1} parent=31 // pred_fallthru
          _
        %s200 = sand.u32 %s29, 1
        %s201 = scalar_lea.sflag [#allocation3], %s200
        %s202 = sand.u32 %s29, 1
        %s203 = smul.addr %s202, 64
        %s204 = scalar_lea.vmem [#allocation2], %s203
        %p205 = pneg %p42
        %p206 = pneg %p39
        %p207 = pneg %p63
        %p208 = pneg %p60
        %p209 = pneg %p84
        %p210 = pneg %p81
        %p211 = pneg %p110
        %p212 = pneg %p107
        %s213 = sand.u32 %s97, 1
        %s214 = scalar_lea.sflag [#allocation4], %s213
        %s215 = sand.u32 %s97, 1
        %s216 = smul.addr %s215, 32
        %s217 = scalar_lea.vmem [#allocation8], %s216
        %v218 = vld [vmem:[%s187] sm:$0xff]
        %v219 = vld [vmem:[%s187 + $0x8] sm:$0xff]
        %v220 = vld [vmem:[%s187 + $0x10] sm:$0xff]
        %v221 = vld [vmem:[%s187 + $0x18] sm:$0xff]
        %v222 = vld [vmem:[%s187 + $0x20] sm:$0xff]
        %v223 = vld [vmem:[%s187 + $0x28] sm:$0xff]
        %v224 = vld [vmem:[%s187 + $0x30] sm:$0xff]
        %v225 = vld [vmem:[%s187 + $0x38] sm:$0xff]
        %v226 = vld [vmem:[#allocation5] sm:$0xff]
        %v227 = vld [vmem:[#allocation5 + $0x8] sm:$0xff]
        %v228 = vld [vmem:[#allocation5 + $0x10] sm:$0xff]
        %v229 = vld [vmem:[#allocation5 + $0x18] sm:$0xff]
        %v230 = vld [vmem:[#allocation5 + $0x20] sm:$0xff]
        %v231 = vld [vmem:[#allocation5 + $0x28] sm:$0xff]
        %v232 = vld [vmem:[#allocation5 + $0x30] sm:$0xff]
        %v233 = vld [vmem:[#allocation5 + $0x38] sm:$0xff]
        %vm234 = vcmask 523264
        %v236 = vsel %vm234, %v218, 0
        %v239 = vsel %vm234, %v219, 0
        %v242 = vsel %vm234, %v220, 0
        %v245 = vsel %vm234, %v221, 0
        %v248 = vsel %vm234, %v222, 0
        %v251 = vsel %vm234, %v223, 0
        %v254 = vsel %vm234, %v224, 0
        %v257 = vsel %vm234, %v225, 0
        %259 = vmatprep.subr.mxu0 0.0
        %260 = vmatpush1.msra.mxu0 %v226
        %261 = vmatprep.subr.mxu0 0.0
        %262 = vmatpush1.msra.mxu0 %v227
        %263 = vmatprep.subr.mxu0 0.0
        %264 = vmatpush1.msra.mxu0 %v228
        %265 = vmatprep.subr.mxu0 0.0
        %266 = vmatpush1.msra.mxu0 %v229
        %267 = vmatprep.subr.mxu0 0.0
        %268 = vmatpush1.msra.mxu0 %v230
        %269 = vmatprep.subr.mxu0 0.0
        %270 = vmatpush1.msra.mxu0 %v231
        %271 = vmatprep.subr.mxu0 0.0
        %272 = vmatpush1.msra.mxu0 %v232
        %273 = vmatprep.subr.mxu0 0.0
        %274 = vmatpush1.msra.mxu0 %v233
        %275 = vmatprep.subr.mxu0 0.0
        %276 = vmatpush1.msra.mxu0 0.0
        %277 = vmatprep.subr.mxu0 0.0
        %278 = vmatpush1.msra.mxu0 0.0
        %279 = vmatprep.subr.mxu0 0.0
        %280 = vmatpush1.msra.mxu0 0.0
        %281 = vmatprep.subr.mxu0 0.0
        %282 = vmatpush1.msra.mxu0 0.0
        %283 = vmatprep.subr.mxu0 0.0
        %284 = vmatpush1.msra.mxu0 0.0
        %285 = vmatprep.subr.mxu0 0.0
        %286 = vmatpush1.msra.mxu0 0.0
        %287 = vmatprep.subr.mxu0 0.0
        %288 = vmatpush1.msra.mxu0 0.0
        %289 = vmatprep.subr.mxu0 0.0
        %290 = vmatpush1.msra.mxu0 0.0
        %291 = vmatprep.subr.mxu0 0.0
        %292 = vmatpush1.msra.mxu0 0.0
        %293 = vmatprep.subr.mxu0 0.0
        %294 = vmatpush1.msra.mxu0 0.0
        %295 = vmatprep.subr.mxu0 0.0
        %296 = vmatpush1.msra.mxu0 0.0
        %297 = vmatprep.subr.mxu0 0.0
        %298 = vmatpush1.msra.mxu0 0.0
        %299 = vmatprep.subr.mxu0 0.0
        %300 = vmatpush1.msra.mxu0 0.0
        %301 = vmatprep.subr.mxu0 0.0
        %302 = vmatpush1.msra.mxu0 0.0
        %303 = vmatprep.subr.mxu0 0.0
        %304 = vmatpush1.msra.mxu0 0.0
        %305 = vmatprep.subr.mxu0 0.0
        %306 = vmatpush1.msra.mxu0 0.0
        %307 = vmatprep.subr.mxu0 0.0
        %308 = vmatpush1.msra.mxu0 0.0
        %309 = vmatprep.subr.mxu0 0.0
        %310 = vmatpush1.msra.mxu0 0.0
        %311 = vmatprep.subr.mxu0 0.0
        %312 = vmatpush1.msra.mxu0 0.0
        %313 = vmatprep.subr.mxu0 0.0
        %314 = vmatpush1.msra.mxu0 0.0
        %315 = vmatprep.subr.mxu0 0.0
        %316 = vmatpush1.msra.mxu0 0.0
        %317 = vmatprep.subr.mxu0 0.0
        %318 = vmatpush1.msra.mxu0 0.0
        %319 = vmatprep.subr.mxu0 0.0
        %320 = vmatpush1.msra.mxu0 0.0
        %321 = vmatprep.subr.mxu0 0.0
        %322 = vmatpush1.msra.mxu0 0.0
        %323 = vmatprep.mubr.f32.mxu0 0.0
        %324 = vmatmul.mubr.f32.gmra.mrb[0].mxu0 %v236
        %v325 = vpop.f32.mrb[0].mxu0
        %v326 = vadd.f32 0.0, %v325
        %v327 = vpop.f32.mrb[0].mxu0
        %328 = vmatprep.mubr.f32.mxu0 0.0
        %329 = vmatmul.mubr.f32.gmra.mrb[0].mxu0 %v239
        %v330 = vpop.f32.mrb[0].mxu0
        %v331 = vadd.f32 0.0, %v330
        %v332 = vpop.f32.mrb[0].mxu0
        %333 = vmatprep.mubr.f32.mxu0 0.0
        %334 = vmatmul.mubr.f32.gmra.mrb[0].mxu0 %v242
        %v335 = vpop.f32.mrb[0].mxu0
        %v336 = vadd.f32 0.0, %v335
        %v337 = vpop.f32.mrb[0].mxu0
        %338 = vmatprep.mubr.f32.mxu0 0.0
        %339 = vmatmul.mubr.f32.gmra.mrb[0].mxu0 %v245
        %v340 = vpop.f32.mrb[0].mxu0
        %v341 = vadd.f32 0.0, %v340
        %v342 = vpop.f32.mrb[0].mxu0
        %343 = vmatprep.mubr.f32.mxu0 0.0
        %344 = vmatmul.mubr.f32.gmra.mrb[0].mxu0 %v248
        %v345 = vpop.f32.mrb[0].mxu0
        %v346 = vadd.f32 0.0, %v345
        %v347 = vpop.f32.mrb[0].mxu0
        %348 = vmatprep.mubr.f32.mxu0 0.0
        %349 = vmatmul.mubr.f32.gmra.mrb[0].mxu0 %v251
        %v350 = vpop.f32.mrb[0].mxu0
        %v351 = vadd.f32 0.0, %v350
        %v352 = vpop.f32.mrb[0].mxu0
        %353 = vmatprep.mubr.f32.mxu0 0.0
        %354 = vmatmul.mubr.f32.gmra.mrb[0].mxu0 %v254
        %v355 = vpop.f32.mrb[0].mxu0
        %v356 = vadd.f32 0.0, %v355
        %v357 = vpop.f32.mrb[0].mxu0
        %358 = vmatprep.mubr.f32.mxu0 0.0
        %359 = vmatmul.mubr.f32.gmra.mrb[0].mxu0 %v257
        %v360 = vpop.f32.mrb[0].mxu0
        %v361 = vadd.f32 0.0, %v360
        %v362 = vpop.f32.mrb[0].mxu0
        %363 = vdwg.mxu0
        %v364 = vmul.f32 %v326, %v326
        %v365 = vmul.f32 %v331, %v331
        %v366 = vmul.f32 %v336, %v336
        %v367 = vmul.f32 %v341, %v341
        %v368 = vmul.f32 %v346, %v346
        %v369 = vmul.f32 %v351, %v351
        %v370 = vmul.f32 %v356, %v356
        %v371 = vmul.f32 %v361, %v361
        %v372 = vld [vmem:[#allocation7] sm:$0xff]
        %v373 = vld [vmem:[#allocation7 + $0x8] sm:$0xff]
        %v374 = vld [vmem:[#allocation7 + $0x10] sm:$0xff]
        %v375 = vld [vmem:[#allocation7 + $0x18] sm:$0xff]
        %376 = vmatprep.subr.mxu0 0.0
        %377 = vmatpush1.xpose.msra.mxu0 %v364
        %378 = vmatprep.subr.mxu0 0.0
        %379 = vmatpush1.xpose.msra.mxu0 %v365
        %380 = vmatprep.subr.mxu0 0.0
        %381 = vmatpush1.xpose.msra.mxu0 %v366
        %382 = vmatprep.subr.mxu0 0.0
        %383 = vmatpush1.xpose.msra.mxu0 %v367
        %384 = vmatprep.subr.mxu0 0.0
        %385 = vmatpush1.xpose.msra.mxu0 %v368
        %386 = vmatprep.subr.mxu0 0.0
        %387 = vmatpush1.xpose.msra.mxu0 %v369
        %388 = vmatprep.subr.mxu0 0.0
        %389 = vmatpush1.xpose.msra.mxu0 %v370
        %390 = vmatprep.subr.mxu0 0.0
        %391 = vmatpush1.xpose.msra.mxu0 %v371
        %392 = vmatprep.subr.mxu0 0.0
        %393 = vmatpush1.xpose.msra.mxu0 0.0
        %394 = vmatprep.subr.mxu0 0.0
        %395 = vmatpush1.xpose.msra.mxu0 0.0
        %396 = vmatprep.subr.mxu0 0.0
        %397 = vmatpush1.xpose.msra.mxu0 0.0
        %398 = vmatprep.subr.mxu0 0.0
        %399 = vmatpush1.xpose.msra.mxu0 0.0
        %400 = vmatprep.subr.mxu0 0.0
        %401 = vmatpush1.xpose.msra.mxu0 0.0
        %402 = vmatprep.subr.mxu0 0.0
        %403 = vmatpush1.xpose.msra.mxu0 0.0
        %404 = vmatprep.subr.mxu0 0.0
        %405 = vmatpush1.xpose.msra.mxu0 0.0
        %406 = vmatprep.subr.mxu0 0.0
        %407 = vmatpush1.xpose.msra.mxu0 0.0
        %408 = vmatprep.subr.mxu0 0.0
        %409 = vmatpush1.xpose.msra.mxu0 0.0
        %410 = vmatprep.subr.mxu0 0.0
        %411 = vmatpush1.xpose.msra.mxu0 0.0
        %412 = vmatprep.subr.mxu0 0.0
        %413 = vmatpush1.xpose.msra.mxu0 0.0
        %414 = vmatprep.subr.mxu0 0.0
        %415 = vmatpush1.xpose.msra.mxu0 0.0
        %416 = vmatprep.subr.mxu0 0.0
        %417 = vmatpush1.xpose.msra.mxu0 0.0
        %418 = vmatprep.subr.mxu0 0.0
        %419 = vmatpush1.xpose.msra.mxu0 0.0
        %420 = vmatprep.subr.mxu0 0.0
        %421 = vmatpush1.xpose.msra.mxu0 0.0
        %422 = vmatprep.subr.mxu0 0.0
        %423 = vmatpush1.xpose.msra.mxu0 0.0
        %424 = vmatprep.subr.mxu0 0.0
        %425 = vmatpush1.xpose.msra.mxu0 0.0
        %426 = vmatprep.subr.mxu0 0.0
        %427 = vmatpush1.xpose.msra.mxu0 0.0
        %428 = vmatprep.subr.mxu0 0.0
        %429 = vmatpush1.xpose.msra.mxu0 0.0
        %430 = vmatprep.subr.mxu0 0.0
        %431 = vmatpush1.xpose.msra.mxu0 0.0
        %432 = vmatprep.subr.mxu0 0.0
        %433 = vmatpush1.xpose.msra.mxu0 0.0
        %434 = vmatprep.subr.mxu0 0.0
        %435 = vmatpush1.xpose.msra.mxu0 0.0
        %436 = vmatprep.subr.mxu0 0.0
        %437 = vmatpush1.xpose.msra.mxu0 0.0
        %438 = vmatprep.subr.mxu0 0.0
        %439 = vmatpush1.xpose.msra.mxu0 0.0
        %440 = vmatprep.mubr.f32.mxu0 0.0
        %441 = vmatmul.mubr.f32.gmra.mrb[0].mxu0 %v372
        %v442 = vpop.f32.mrb[0].mxu0
        %v443 = vadd.f32 0.0, %v442
        %v444 = vpop.f32.mrb[0].mxu0
        %445 = vmatprep.mubr.f32.mxu0 0.0
        %446 = vmatmul.mubr.f32.gmra.mrb[0].mxu0 %v373
        %v447 = vpop.f32.mrb[0].mxu0
        %v448 = vadd.f32 0.0, %v447
        %v449 = vpop.f32.mrb[0].mxu0
        %450 = vmatprep.mubr.f32.mxu0 0.0
        %451 = vmatmul.mubr.f32.gmra.mrb[0].mxu0 %v374
        %v452 = vpop.f32.mrb[0].mxu0
        %v453 = vadd.f32 0.0, %v452
        %v454 = vpop.f32.mrb[0].mxu0
        %455 = vmatprep.mubr.f32.mxu0 0.0
        %456 = vmatmul.mubr.f32.gmra.mrb[0].mxu0 %v375
        %v457 = vpop.f32.mrb[0].mxu0
        %v458 = vadd.f32 0.0, %v457
        %v459 = vpop.f32.mrb[0].mxu0
        %460 = vdwg.mxu0
        %v461 = vmax.f32 %v443, 1e-10
        %v462 = vmax.f32 %v448, 1e-10
        %v463 = vmax.f32 %v453, 1e-10
        %v464 = vmax.f32 %v458, 1e-10
        %v465 = vlog2.pop %v461
        %v466 = vmul.f32 %v465, 0.6931472
        %v467 = vlog2.pop %v462
        %v468 = vmul.f32 %v467, 0.6931472
        %v469 = vlog2.pop %v463
        %v470 = vmul.f32 %v469, 0.6931472
        %v471 = vlog2.pop %v464
        %v472 = vmul.f32 %v471, 0.6931472
        %v473 = vmul.f32 %v466, 4.3429446
        %v474 = vmul.f32 %v468, 4.3429446
        %v475 = vmul.f32 %v470, 4.3429446
        %v476 = vmul.f32 %v472, 4.3429446
        %477 = vst.msk [vmem:[%s217] sm:$0xff] %vm234, %v473
        %478 = vst.msk [vmem:[%s217 + $0x8] sm:$0xff] %vm234, %v474
        %479 = vst.msk [vmem:[%s217 + $0x10] sm:$0xff] %vm234, %v475
        %480 = vst.msk [vmem:[%s217 + $0x18] sm:$0xff] %vm234, %v476
        %s481 = sand.u32 %s97, 1
        %s482 = scalar_lea.sflag [#allocation4], %s481
        %s483 = sand.u32 %s97, 1
        %s484 = smul.addr %s483, 32
        %s485 = scalar_lea.vmem [#allocation8], %s484
        // Predicated region
        $region45: #{tpu_custom_call.1} parent=31 // pred_check
          %p486 = pneg %p107
        $region46: #{tpu_custom_call.1} parent=31 // pred_check_branch
          %488 = sbr.rel (%p486) target = $region48
        $region47: #{tpu_custom_call.1} parent=31 // pred_region
          %s490 = ssub.s32 512, 512
          %491 = vsyncadd %s482, %s490
          %s492 = smul.addr %s21, 4
          %s493 = smul.addr %s492, 128
          %s494 = scalar_lea.hbm %s3, %s493
          %s495 = sshll.u32 %s485, 4
          %s496 = int_to_ptr.vmem [resolvable:$true] %s495
          %501 = dma.vmem_to_hbm [thread:$0]  %s496, 512, %s494, %s482, 128, 128, 8
        $region48: #{tpu_custom_call.1} parent=31 // pred_fallthru
          _
      $region32: #{tpu_custom_call.1} parent=5 // pred_fallthru
        _
      %p502 = scmp.le.s32.totalorder 2, %s16
      // Predicated region
      $region49: #{tpu_custom_call.1} parent=5 // pred_check
        %p503 = pneg %p502
      $region50: #{tpu_custom_call.1} parent=5 // pred_check_branch
        %505 = sbr.rel (%p503) target = $region52
      $region51: #{tpu_custom_call.1} parent=5 // pred_region
        %s506 = ssub.s32 %s16, 2
        // Predicated region
        $region53: #{tpu_custom_call.1} parent=51 // pred_check
          %p507 = pneg %p113
        $region54: #{tpu_custom_call.1} parent=51 // pred_check_branch
          %509 = sbr.rel (%p507) target = $region56
        $region55: #{tpu_custom_call.1} parent=51 // pred_region
          %s510 = sand.u32 %s98, 1
          %s511 = scalar_lea.sflag [#allocation4], %s510
          %s512 = sand.u32 %s98, 1
          %s513 = smul.addr %s512, 32
          %s514 = scalar_lea.vmem [#allocation8], %s513
          %515 = dma.done %s511, 512
        $region56: #{tpu_custom_call.1} parent=51 // pred_fallthru
          _
      $region52: #{tpu_custom_call.1} parent=5 // pred_fallthru
        _
    $region6: #{tpu_custom_call.1} parent=1 // loop_footer
      %s20 = sadd.s32 1, %s16
    $region7: #{tpu_custom_call.1} parent=1 // loop_footer_branch
      %15 = sbr.rel target = $region3
    $region8: #{tpu_custom_call.1} parent=1 // loop_exit
      _
    %516 = vsyncpa [#allocation3], 1
    %s517 = scalar_lea.sflag [#allocation3], 1
    %518 = vsyncpa %s517, 1
    %519 = vsyncpa [#allocation6], 1
    %520 = vsyncpa [#allocation4], 1
    %s521 = scalar_lea.sflag [#allocation4], 1
    %522 = vsyncpa %s521, 1

</llo_original>
